<compile_context>
chip_gen: v6e
topology: v6e:2x2x1
jax: 0.10.0
libtpu: 0.0.40
codegen_flags: <defaults>
</compile_context>

<pallas_src>
import functools

import jax
import jax.numpy as jnp
from jax.experimental import pallas as pl
from jax.experimental.pallas import tpu as pltpu


def _round_up(v, m):
    return (v + m - 1) // m * m


def _tpu_config():
    """Returns (vmem_limit_bytes, target_block_bytes, num_tensorcores)."""
    mib = 1024 * 1024
    vmem_phys = None
    try:
        vmem_phys = getattr(pltpu.get_tpu_info(), "vmem_capacity_bytes", None)
    except Exception:  # query unavailable -> conservative defaults
        vmem_phys = None
    if vmem_phys is not None and vmem_phys <= 64 * mib:
        # v7x-class: 64 MiB physical VMEM, 2 TensorCores, ~3.2 TB/s HBM.
        return 32 * mib, 8 * mib, 2
    if vmem_phys is not None:
        # v5e/v6e-class: 128 MiB physical VMEM, single TensorCore.
        return 64 * mib, 16 * mib, 1
    # Unknown generation: conservative config that is safe everywhere.
    return 32 * mib, 4 * mib, 2


def _pick_spatial_tile(spatial, max_ts):
    """Spatial (lane) tile and whether the final tile needs an OOB mask.

    Prefers the largest multiple of 128 that divides `spatial` (no mask, no
    ragged DMA); falls back to `max_ts` with a mask on the final tile only.
    """
    if spatial <= max_ts:
        return spatial, False            # single full-extent tile
    for ts in range(max_ts, 127, -128):  # max_ts is a multiple of 128
        if spatial % ts == 0:
            return ts, False
    return max_ts, True


def _lane_chunk_sum(x, n_chunks):
    """(tr, n_chunks*128) -> (tr, 128): pairwise-sum 128-lane chunks (VPU only)."""
    chunks = [x[:, i * 128:(i + 1) * 128] for i in range(n_chunks)]
    while len(chunks) > 1:
        nxt = [chunks[i] + chunks[i + 1] for i in range(0, len(chunks) - 1, 2)]
        if len(chunks) % 2:
            nxt.append(chunks[-1])
        chunks = nxt
    return chunks[0]


def _avgpool_single_kernel(x_ref, o_ref, *, spatial):
    # Whole spatial extent in one tile: reduce and normalize directly.
    x = x_ref[...].astype(jnp.float32)
    o_ref[...] = (jnp.sum(x, axis=1, keepdims=True) * (1.0 / float(spatial))).astype(
        o_ref.dtype
    )


def _avgpool_tiled_kernel(x_ref, o_ref, acc_ref, *, spatial, ts, needs_mask):
    # x_ref:   (TR, TS) tile of the (N*C, H*W) view, native dtype (TS % 128 == 0)
    # o_ref:   (TR, 1)   output tile (resident across the reduction axis)
    # acc_ref: (TR, 128) lane-dense f32 accumulator scratch
    k = pl.program_id(1)
    last = pl.num_programs(1) - 1
    n_chunks = ts // 128

    @pl.when(k == 0)
    def _init():
        acc_ref[...] = jnp.zeros_like(acc_ref)

    if needs_mask:
        # Mask is needed only on the final (ragged) spatial tile.
        @pl.when(k != last)
        def _full_tiles():
            acc_ref[...] += _lane_chunk_sum(x_ref[...].astype(jnp.float32), n_chunks)

        @pl.when(k == last)
        def _ragged_tile():
            x = x_ref[...].astype(jnp.float32)
            col = jax.lax.broadcasted_iota(jnp.int32, x.shape, 1)
            valid = spatial - k * ts
            x = jnp.where(col < valid, x, 0.0)
            acc_ref[...] += _lane_chunk_sum(x, n_chunks)
    else:
        acc_ref[...] += _lane_chunk_sum(x_ref[...].astype(jnp.float32), n_chunks)

    @pl.when(k == last)
    def _finalize():
        # One cross-lane (XLU) reduce per row tile, then normalize and store.
        total = jnp.sum(acc_ref[...], axis=1, keepdims=True)
        o_ref[...] = (total * (1.0 / float(spatial))).astype(o_ref.dtype)


def global_avg_pool2d(x, *, max_spatial_tile=None, max_row_tile=512):
    """Global average pool, NCHW input: (N, C, H, W) -> (N, C)."""
    n, c, h, w = x.shape
    rows, spatial = n * c, h * w
    itemsize = jnp.dtype(x.dtype).itemsize

    # Zero-cost view of the contiguous NCHW buffer: sublanes=(n,c), lanes=(h,w).
    x2 = x.reshape(rows, spatial)

    vmem_limit, target_block_bytes, num_cores = _tpu_config()

    # --- Row (sublane) tile ---------------------------------------------------
    sublane_min = 8 * max(1, 4 // itemsize)  # 8 f32, 16 bf16/f16, 32 int8/fp8
    max_row_tile = max(sublane_min, (max_row_tile // sublane_min) * sublane_min)
    if rows > max_row_tile:
        tr = max_row_tile
    elif num_cores >= 2 and rows > sublane_min:
        # Split rows into >= 2 row tiles so both TensorCores (grid axis 0 is
        # "parallel") get work on v7x-class parts.
        tr = min(_round_up((rows + 1) // 2, sublane_min), rows)
    else:
        tr = rows

    # --- Spatial (lane) tile ----------------------------------------------------
    if max_spatial_tile is None:
        max_ts = target_block_bytes // (tr * itemsize)
        max_ts = max(128, min(16384, (max_ts // 128) * 128))
    else:
        max_ts = max(128, (max_spatial_tile // 128) * 128)
    ts, needs_mask = _pick_spatial_tile(spatial, max_ts)

    row_grid = pl.cdiv(rows, tr)
    itembytes = rows * spatial * itemsize + rows * itemsize
    cost = pl.CostEstimate(flops=rows * spatial, transcendentals=0,
                           bytes_accessed=itembytes)
    out_shape = jax.ShapeDtypeStruct((rows, 1), x.dtype)

    if ts == spatial:
        # Single spatial tile: no accumulator, no reduction axis.
        out = pl.pallas_call(
            functools.partial(_avgpool_single_kernel, spatial=spatial),
            out_shape=out_shape,
            grid_spec=pltpu.PrefetchScalarGridSpec(
                num_scalar_prefetch=0,
                grid=(row_grid,),
                in_specs=[pl.BlockSpec((tr, spatial), lambda i: (i, 0))],
                out_specs=pl.BlockSpec((tr, 1), lambda i: (i, 0)),
            ),
            compiler_params=pltpu.CompilerParams(
                dimension_semantics=("parallel",),
                vmem_limit_bytes=vmem_limit,
            ),
            cost_estimate=cost,
        )(x2)
    else:
        # Tiled reduction over the spatial axis (ts is a multiple of 128 here).
        kernel = functools.partial(
            _avgpool_tiled_kernel, spatial=spatial, ts=ts, needs_mask=needs_mask
        )
        out = pl.pallas_call(
            kernel,
            out_shape=out_shape,
            grid_spec=pltpu.PrefetchScalarGridSpec(
                num_scalar_prefetch=0,
                grid=(row_grid, pl.cdiv(spatial, ts)),
                in_specs=[pl.BlockSpec((tr, ts), lambda i, k: (i, k))],
                out_specs=pl.BlockSpec((tr, 1), lambda i, k: (i, 0)),
                scratch_shapes=[pltpu.VMEM((tr, 128), jnp.float32)],
            ),
            compiler_params=pltpu.CompilerParams(
                dimension_semantics=("parallel", "arbitrary"),
                vmem_limit_bytes=vmem_limit,
            ),
            cost_estimate=cost,
        )(x2)

    return out.reshape(n, c)


if __name__ == "__main__":
    key = jax.random.PRNGKey(0)

    # Small NCHW feature map: N=2, C=4, H=W=16  -> (2, 4).
    x = jax.random.normal(key, (2, 4, 16, 16), dtype=jnp.float32)
    y = jax.block_until_ready(global_avg_pool2d(x))
    assert y.shape == (2, 4)
    assert jnp.allclose(y, jnp.mean(x, axis=(2, 3)), atol=1e-5, rtol=1e-5)

    # Force the tiled-reduction path (no mask: 256 is a multiple of 128).
    y_t = jax.block_until_ready(global_avg_pool2d(x, max_spatial_tile=128))
    assert jnp.allclose(y_t, jnp.mean(x, axis=(2, 3)), atol=1e-5, rtol=1e-5)

    # Force the tiled path with a ragged final tile (225 % 128 != 0 -> mask on last tile).
    x_m = jax.random.normal(jax.random.PRNGKey(1), (2, 3, 15, 15), dtype=jnp.float32)
    y_m = jax.block_until_ready(global_avg_pool2d(x_m, max_spatial_tile=128))
    assert jnp.allclose(y_m, jnp.mean(x_m, axis=(2, 3)), atol=1e-5, rtol=1e-5)

    # Non-lane-aligned small spatial extent (single-tile path, full-extent block).
    x_s = jax.random.normal(jax.random.PRNGKey(2), (2, 3, 5, 5), dtype=jnp.float32)
    y_s = jax.block_until_ready(global_avg_pool2d(x_s))
    assert jnp.allclose(y_s, jnp.mean(x_s, axis=(2, 3)), atol=1e-5, rtol=1e-5)

    print("KERNEL_OK")
</pallas_src>

<mosaic_0001>
module attributes {stable_mosaic.version = 11 : i64} {
  func.func @_avgpool_single_kernel(%arg0: i32, %arg1: memref<8x256xf32, #tpu.memory_space<vmem>>, %arg2: memref<8x1xf32, #tpu.memory_space<vmem>>) attributes {dimension_semantics = [#tpu.dimension_semantics<parallel>], iteration_bounds = array<i64: 1>, scalar_prefetch = 0 : i64, scratch_operands = 0 : i64, tpu.core_type = #tpu.core_type<tc>, window_params = [{transform_indices = @transform_0, window_bounds = array<i64: 8, 256>}, {transform_indices = @transform_1, window_bounds = array<i64: 8, 1>}]} {
    %c0 = arith.constant 0 : index
    %c0_0 = arith.constant 0 : index
    %0 = vector.load %arg1[%c0, %c0_0] : memref<8x256xf32, #tpu.memory_space<vmem>>, vector<8x256xf32>
    %cst = arith.constant dense<0.000000e+00> : vector<8xf32>
    %1 = vector.multi_reduction <add>, %0, %cst [1] : vector<8x256xf32> to vector<8xf32>
    %2 = vector.shape_cast %1 : vector<8xf32> to vector<8x1xf32>
    %cst_1 = arith.constant 3.906250e-03 : f32
    %3 = vector.broadcast %cst_1 : f32 to vector<8x1xf32>
    %4 = arith.mulf %2, %3 : vector<8x1xf32>
    %c0_2 = arith.constant 0 : index
    %c0_3 = arith.constant 0 : index
    %5 = vector.load %arg2[%c0_2, %c0_3] : memref<8x1xf32, #tpu.memory_space<vmem>>, vector<8x1xf32>
    tpu.vector_store %arg2[%c0_2, %c0_3], %4 {strides = array<i32>} : memref<8x1xf32, #tpu.memory_space<vmem>>, vector<8x1xf32>,
    return
  }
  func.func @transform_0(%arg0: i32) -> (i32, i32) {
    %c0_i32 = arith.constant 0 : i32
    %c0_i32_0 = arith.constant 0 : i32
    return %arg0, %c0_i32 : i32, i32
  }
  func.func @transform_1(%arg0: i32) -> (i32, i32) {
    %c0_i32 = arith.constant 0 : i32
    %c0_i32_0 = arith.constant 0 : i32
    return %arg0, %c0_i32 : i32, i32
  }
}

</mosaic_0001>

<llo_original>
// kernel: tpu_custom_call.1
$region0: #{tpu_custom_call.1}
  #allocation0 [shape = 'u32[]', space=smem, size = 0x4, offset = 0x4, fixed_abs, tag = 'smem constant byte address 0x4 - core index']
  #allocation1 [shape = 'u32[144,128]{1,0:T(1,128)}', space=vmem, size = 0x12000, scoped, tag = 'internal scratch']
  %s0 = inlined_call_operand.hbm [shape: f32[8,256], index: 0, kind: input, shape index: {}]
  %s1 = inlined_call_operand.vmem [shape: f32[8,1], index: 1, kind: output, shape index: {}]
  %s2 = sld [smem:[#allocation0]]
  $region18: #{tpu_custom_call.1} parent=0
    _
  %s4 = ssub.s32 1, %s2
  %s5 = scalar_select 0, %s4, %s2
  $region1: #{tpu_custom_call.1} parent=0
    #allocation2 [shape = 'u8[8192]{0}', space=vmem, size = 0x2000, scoped, tag = 'input window, operand 0, single buffered']
    #allocation3 [shape = 's32[1]{0}', space=sflag, size = 0x4, scoped, tag = 'scoped memory for tpu_custom_call.1']
    %6 = vsyncpa [#allocation3], 0
    // Predicated region
    $region2: #{tpu_custom_call.1} parent=1 // pred_check
      _
    $region3: #{tpu_custom_call.1} parent=1 // pred_check_branch
      %8 = sbr.rel (0) target = $region5
    $region4: #{tpu_custom_call.1} parent=1 // pred_region
      %s10 = ssub.s32 256, 256
      %11 = vsyncadd [#allocation3], %s10
      %s13 = sshll.u32 [#allocation2], 4
      %s14 = int_to_ptr.vmem [resolvable:$true] %s13
      %16 = dma.hbm_to_vmem [thread:$0]  %s0, 256, %s14, [#allocation3]
    $region5: #{tpu_custom_call.1} parent=1 // pred_fallthru
      _
    // Predicated region
    $region6: #{tpu_custom_call.1} parent=1 // pred_check
      _
    $region7: #{tpu_custom_call.1} parent=1 // pred_check_branch
      %18 = sbr.rel (0) target = $region9
    $region8: #{tpu_custom_call.1} parent=1 // pred_region
      %19 = dma.done [#allocation3], 256
    $region9: #{tpu_custom_call.1} parent=1 // pred_fallthru
      _
    %v20 = vld [vmem:[#allocation2] sm:$0xff]
    %v21 = vld [vmem:[#allocation2 + $0x8] sm:$0xff]
    %v22 = vadd.f32 %v20, %v21
    %23 = vadd.xlane.f32.xlu0 %v22
    %v24 = vpop.xlane.xlu0 %23
    %v25 = vmul.f32 %v24, 0.00390625
    %vm26 = vcmask 7168
    %27 = vst.msk [vmem:[%s1] sm:$0xff] %vm26, %v25
    // Predicated region
    $region10: #{tpu_custom_call.1} parent=1 // pred_check
      _
    $region11: #{tpu_custom_call.1} parent=1 // pred_check_branch
      %29 = sbr.rel (0) target = $region13
    $region12: #{tpu_custom_call.1} parent=1 // pred_region
      _
    $region13: #{tpu_custom_call.1} parent=1 // pred_fallthru
      _
    // Predicated region
    $region14: #{tpu_custom_call.1} parent=1 // pred_check
      _
    $region15: #{tpu_custom_call.1} parent=1 // pred_check_branch
      %31 = sbr.rel (0) target = $region17
    $region16: #{tpu_custom_call.1} parent=1 // pred_region
      _
    $region17: #{tpu_custom_call.1} parent=1 // pred_fallthru
      _
    %32 = vsyncpa [#allocation3], 1

</llo_original>
